<compile_context>
chip_gen: v6e
topology: v6e:2x2x1
jax: 0.10.0
libtpu: 0.0.40
codegen_flags: <defaults>
</compile_context>

<pallas_src>
import numpy as np
import jax
import jax.numpy as jnp
from jax.experimental import pallas as pl
from jax.experimental.pallas import tpu as pltpu


def build_positional_encoding(pad_size: int, embed: int) -> jnp.ndarray:
    """Deterministic sinusoidal table, identical to the torch __init__."""
    pe = np.array(
        [
            [pos / 10000.0 ** (i // 2 * 2.0 / embed) for i in range(embed)]
            for pos in range(pad_size)
        ],
        dtype=np.float32,
    )
    pe[:, 0::2] = np.sin(pe[:, 0::2])
    pe[:, 1::2] = np.cos(pe[:, 1::2])
    return jnp.asarray(pe)


def _dropout_threshold(p: float) -> np.uint32:
    # drop iff bits < threshold; P(drop) = threshold / 2^32 = p (within 2^-32)
    t = int(round(float(p) * float(2 ** 32)))
    return np.uint32(min(max(t, 0), 2 ** 32 - 1))


def _pick_tile(dim: int, target: int, align: int) -> int:
    """Largest tile <= target that is a multiple of `align` and divides `dim`,
    falling back to the full dim (full-extent blocks are always legal)."""
    if dim <= target:
        return dim
    t = (target // align) * align
    while t >= align:
        if dim % t == 0:
            return t
        t -= align
    return dim


def _add_pe_kernel(x_ref, pe_ref, o_ref):
    # (bm, bn) + (1, bn) broadcast over sublanes; pe is already x.dtype.
    o_ref[...] = x_ref[...] + pe_ref[...]


def _make_add_pe_dropout_kernel(dropout_p: float):
    threshold = _dropout_threshold(dropout_p)
    scale = 1.0 / (1.0 - float(dropout_p))

    def kernel(x_ref, pe_ref, bits_ref, o_ref):
        out = x_ref[...] + pe_ref[...]            # (bm, bn) + (1, bn)
        keep = bits_ref[...] >= threshold         # pure uint32 compare
        o_ref[...] = jnp.where(
            keep, out * jnp.asarray(scale, out.dtype), jnp.zeros_like(out)
        )

    return kernel


# Tile targets: >=512 rows amortizes the ~0.35us per-grid-step overhead; 1024-lane
# column tiles keep the double-buffered footprint of (x, bits, out) blocks well
# under the default scoped-VMEM limit on all of v5e / v6e / v7x.
_ROW_TILE_TARGET = 512
_COL_TILE_TARGET = 1024


def positional_encoding_forward(x, pe, *, dropout_p=0.1, training=True, rng_key=None):
    """out = dropout(x + pe); x: (B, P, E), pe: (P, E)."""
    B, P, E = x.shape
    assert pe.shape == (P, E)
    apply_dropout = bool(training) and float(dropout_p) > 0.0

    # Lane-dense flatten: last dim becomes P*E; pe broadcasts over the B rows.
    n = P * E
    x2 = x.reshape(B, n)
    pe2 = pe.astype(x.dtype).reshape(1, n)

    bm = _pick_tile(B, _ROW_TILE_TARGET, 8)
    bn = _pick_tile(n, _COL_TILE_TARGET, 128)
    grid = (n // bn, B // bm)  # (column tiles, row tiles); row axis is innermost

    x_spec = pl.BlockSpec((bm, bn), lambda c, r: (r, c))
    pe_spec = pl.BlockSpec((1, bn), lambda c, r: (0, c))  # resident across inner r
    out_spec = pl.BlockSpec((bm, bn), lambda c, r: (r, c))

    compiler_params = pltpu.CompilerParams(
        dimension_semantics=("parallel", "parallel")
    )

    if apply_dropout:
        if rng_key is None:
            rng_key = jax.random.PRNGKey(0)
        bits = jax.random.bits(rng_key, (B, n), dtype=jnp.uint32)
        out2 = pl.pallas_call(
            _make_add_pe_dropout_kernel(float(dropout_p)),
            out_shape=jax.ShapeDtypeStruct((B, n), x.dtype),
            grid=grid,
            in_specs=[x_spec, pe_spec, pl.BlockSpec((bm, bn), lambda c, r: (r, c))],
            out_specs=out_spec,
            input_output_aliases={0: 0},  # write the result over x's buffer
            compiler_params=compiler_params,
        )(x2, pe2, bits)
    else:
        out2 = pl.pallas_call(
            _add_pe_kernel,
            out_shape=jax.ShapeDtypeStruct((B, n), x.dtype),
            grid=grid,
            in_specs=[x_spec, pe_spec],
            out_specs=out_spec,
            input_output_aliases={0: 0},
            compiler_params=compiler_params,
        )(x2, pe2)

    return out2.reshape(B, P, E)


if __name__ == "__main__":
    # Small shapes implied by the module: batch=2, pad_size=8, embed=32.
    batch, pad_size, embed = 2, 8, 32
    dropout = 0.1

    key = jax.random.PRNGKey(0)
    x_key, drop_key = jax.random.split(key)
    x = jax.random.normal(x_key, (batch, pad_size, embed), dtype=jnp.float32)
    pe = build_positional_encoding(pad_size, embed)

    ref = np.asarray(x) + np.asarray(pe)[None, :, :]

    # --- eval path (dropout is identity): must match x + pe ---
    out_eval = jax.block_until_ready(
        positional_encoding_forward(x, pe, dropout_p=dropout, training=False)
    )
    np.testing.assert_allclose(np.asarray(out_eval), ref, rtol=1e-6, atol=1e-6)

    # --- training path: exact reference built from the same bits/threshold ---
    out_train = jax.block_until_ready(
        positional_encoding_forward(
            x, pe, dropout_p=dropout, training=True, rng_key=drop_key
        )
    )
    bits = np.asarray(
        jax.random.bits(drop_key, (batch, pad_size * embed), dtype=jnp.uint32)
    ).reshape(batch, pad_size, embed)
    keep = bits >= _dropout_threshold(dropout)
    expected = np.where(keep, ref / (1.0 - dropout), 0.0)
    np.testing.assert_allclose(np.asarray(out_train), expected, rtol=1e-5, atol=1e-6)

    print("KERNEL_OK")
</pallas_src>

<mosaic_0001>
module attributes {stable_mosaic.version = 11 : i64} {
  func.func @_add_pe_kernel(%arg0: i32, %arg1: i32, %arg2: memref<2x256xf32, #tpu.memory_space<vmem>>, %arg3: memref<1x256xf32, #tpu.memory_space<vmem>>, %arg4: memref<2x256xf32, #tpu.memory_space<vmem>>) attributes {dimension_semantics = [#tpu.dimension_semantics<parallel>, #tpu.dimension_semantics<parallel>], iteration_bounds = array<i64: 1, 1>, scalar_prefetch = 0 : i64, scratch_operands = 0 : i64, tpu.core_type = #tpu.core_type<tc>, window_params = [{transform_indices = @transform_0, window_bounds = array<i64: 2, 256>}, {transform_indices = @transform_1, window_bounds = array<i64: 1, 256>}, {transform_indices = @transform_2, window_bounds = array<i64: 2, 256>}]} {
    %c0 = arith.constant 0 : index
    %c0_0 = arith.constant 0 : index
    %0 = vector.load %arg2[%c0, %c0_0] : memref<2x256xf32, #tpu.memory_space<vmem>>, vector<2x256xf32>
    %c0_1 = arith.constant 0 : index
    %c0_2 = arith.constant 0 : index
    %1 = vector.load %arg3[%c0_1, %c0_2] : memref<1x256xf32, #tpu.memory_space<vmem>>, vector<1x256xf32>
    %2 = vector.broadcast %1 : vector<1x256xf32> to vector<2x256xf32>
    %3 = arith.addf %0, %2 : vector<2x256xf32>
    %c0_3 = arith.constant 0 : index
    %c0_4 = arith.constant 0 : index
    %4 = vector.load %arg4[%c0_3, %c0_4] : memref<2x256xf32, #tpu.memory_space<vmem>>, vector<2x256xf32>
    tpu.vector_store %arg4[%c0_3, %c0_4], %3 {strides = array<i32>} : memref<2x256xf32, #tpu.memory_space<vmem>>, vector<2x256xf32>,
    return
  }
  func.func @transform_0(%arg0: i32, %arg1: i32) -> (i32, i32) {
    %c0_i32 = arith.constant 0 : i32
    return %arg1, %arg0 : i32, i32
  }
  func.func @transform_1(%arg0: i32, %arg1: i32) -> (i32, i32) {
    %c0_i32 = arith.constant 0 : i32
    %c0_i32_0 = arith.constant 0 : i32
    return %c0_i32, %arg0 : i32, i32
  }
  func.func @transform_2(%arg0: i32, %arg1: i32) -> (i32, i32) {
    %c0_i32 = arith.constant 0 : i32
    return %arg1, %arg0 : i32, i32
  }
}

</mosaic_0001>

<llo_original>
// kernel: tpu_custom_call.1
$region0: #{tpu_custom_call.1}
  #allocation0 [shape = 'u32[]', space=smem, size = 0x4, offset = 0x4, fixed_abs, tag = 'smem constant byte address 0x4 - core index']
  #allocation1 [shape = 'u32[144,128]{1,0:T(1,128)}', space=vmem, size = 0x12000, scoped, tag = 'internal scratch']
  %s0 = inlined_call_operand.hbm [shape: f32[2,256], index: 0, kind: input, shape index: {}, may-alias: {0,2}]
  %s1 = inlined_call_operand.vmem [shape: f32[1,256], index: 1, kind: input, shape index: {}]
  %s2 = inlined_call_operand.hbm [shape: f32[2,256], index: 2, kind: output, shape index: {}, may-alias: {0,2}]
  %s3 = sld [smem:[#allocation0]]
  $region22: #{tpu_custom_call.1} parent=0
    _
  %s5 = ssub.s32 1, %s3
  %s6 = scalar_select 0, %s5, %s3
  $region1: #{tpu_custom_call.1} parent=0
    #allocation2 [shape = 'u8[2048]{0}', space=vmem, size = 0x800, scoped, tag = 'input window, operand 0, single buffered']
    #allocation3 [shape = 's32[1]{0}', space=sflag, size = 0x4, scoped, tag = 'scoped memory for tpu_custom_call.1']
    #allocation4 [shape = 's32[1]{0}', space=sflag, size = 0x4, scoped, tag = 'scoped memory for tpu_custom_call.1']
    #allocation5 [shape = 'u8[2048]{0}', space=vmem, size = 0x800, scoped, tag = 'output window, operand 0, single buffered']
    %7 = vsyncpa [#allocation3], 0
    %8 = vsyncpa [#allocation4], 0
    // Predicated region
    $region2: #{tpu_custom_call.1} parent=1 // pred_check
      _
    $region3: #{tpu_custom_call.1} parent=1 // pred_check_branch
      %10 = sbr.rel (0) target = $region5
    $region4: #{tpu_custom_call.1} parent=1 // pred_region
      %s12 = ssub.s32 64, 64
      %13 = vsyncadd [#allocation3], %s12
      %s15 = sshll.u32 [#allocation2], 4
      %s16 = int_to_ptr.vmem [resolvable:$true] %s15
      %18 = dma.hbm_to_vmem [thread:$0]  %s0, 64, %s16, [#allocation3]
    $region5: #{tpu_custom_call.1} parent=1 // pred_fallthru
      _
    // Predicated region
    $region6: #{tpu_custom_call.1} parent=1 // pred_check
      _
    $region7: #{tpu_custom_call.1} parent=1 // pred_check_branch
      %20 = sbr.rel (0) target = $region9
    $region8: #{tpu_custom_call.1} parent=1 // pred_region
      _
    $region9: #{tpu_custom_call.1} parent=1 // pred_fallthru
      _
    // Predicated region
    $region10: #{tpu_custom_call.1} parent=1 // pred_check
      _
    $region11: #{tpu_custom_call.1} parent=1 // pred_check_branch
      %22 = sbr.rel (0) target = $region13
    $region12: #{tpu_custom_call.1} parent=1 // pred_region
      %23 = dma.done [#allocation3], 64
    $region13: #{tpu_custom_call.1} parent=1 // pred_fallthru
      _
    %v24 = vld [vmem:[#allocation2] sm:$0xf]
    %v25 = vld [vmem:[%s1] sm:$0x3]
    %v27 = vlaneseq
    %v28 = vshrl.u32 %v27, 7
    %v29 = vsub.s32 0, %v28
    %v30 = vrot.slane %v25, %v29
    %v31 = vlaneseq
    %v32 = vshrl.u32 %v31, 7
    %v33 = vsub.s32 1, %v32
    %v34 = vrot.slane %v25, %v33
    %v35 = vcombine.low %v30, %v34
    %v37 = vunpack.c.l.s4 1983009808
    %v38 = vunpack.c.0.s8 %v37
    %v39 = vlaneseq
    %v40 = vshrl.u32 %v39, 7
    %v41 = vsub.s32 %v38, %v40
    %v42 = vrot.slane %v35, %v41
    %v44 = vadd.f32 %v24, %v42
    %45 = vst [vmem:[#allocation5] sm:$0xf] %v44
    // Predicated region
    $region14: #{tpu_custom_call.1} parent=1 // pred_check
      _
    $region15: #{tpu_custom_call.1} parent=1 // pred_check_branch
      %47 = sbr.rel (0) target = $region17
    $region16: #{tpu_custom_call.1} parent=1 // pred_region
      %s49 = ssub.s32 64, 64
      %50 = vsyncadd [#allocation4], %s49
      %s52 = sshll.u32 [#allocation5], 4
      %s53 = int_to_ptr.vmem [resolvable:$true] %s52
      %55 = dma.vmem_to_hbm [thread:$0]  %s53, 64, %s2, [#allocation4]
    $region17: #{tpu_custom_call.1} parent=1 // pred_fallthru
      _
    // Predicated region
    $region18: #{tpu_custom_call.1} parent=1 // pred_check
      _
    $region19: #{tpu_custom_call.1} parent=1 // pred_check_branch
      %57 = sbr.rel (0) target = $region21
    $region20: #{tpu_custom_call.1} parent=1 // pred_region
      %58 = dma.done [#allocation4], 64
    $region21: #{tpu_custom_call.1} parent=1 // pred_fallthru
      _
    %59 = vsyncpa [#allocation3], 1
    %60 = vsyncpa [#allocation4], 1

</llo_original>
